<compile_context>
chip_gen: v7x
topology: tpu7x:2x2x1
jax: 0.10.0
libtpu: 0.0.40
codegen_flags: <defaults>
</compile_context>

<pallas_src>
import jax
import jax.numpy as jnp
from jax.experimental import pallas as pl
from jax.experimental.pallas import tpu as pltpu

LANE_DIM = 512              # lane-dense last dim of the slab (multiple of 128)
TILE_BYTES = 2 * 1024 * 1024  # target bytes per tile buffer (safe on v5e/v6e/v7x)
MIN_GRID_STEPS = 4          # keep both v7x TensorCores fed on mid-size inputs
MIN_PALLAS_ELEMENTS = 65536  # below this, a fused XLA elementwise op is faster


def _sublane(dtype) -> int:
    # Sublane granularity: 8 rows for 4-byte, 16 for 2-byte, 32 for 1-byte dtypes.
    return max(8, 32 // jnp.dtype(dtype).itemsize)


def _round_up(v: int, m: int) -> int:
    return ((v + m - 1) // m) * m


def _linreg_kernel(w_ref, b_ref, x_ref, o_ref):
    # w_ref, b_ref: SMEM (1,) f32 scalars; x_ref, o_ref: (tile_rows, LANE_DIM) VMEM tiles.
    y = x_ref[...].astype(jnp.float32) * w_ref[0] + b_ref[0]
    o_ref[...] = y.astype(o_ref.dtype)


def _affine_2d(x2d: jax.Array, w32: jax.Array, b32: jax.Array) -> jax.Array:
    """Runs the lane-dense affine kernel over a (rows, LANE_DIM) slab."""
    rows, lane = x2d.shape
    itemsize = x2d.dtype.itemsize
    sub = _sublane(x2d.dtype)

    # Tile size by bytes (not rows) so sub-f32 dtypes keep full-size DMAs.
    max_rows = max(sub, (TILE_BYTES // (lane * itemsize)) // sub * sub)
    # Guarantee >= MIN_GRID_STEPS grid steps where possible so the 'parallel'
    # axis shards across both v7x TensorCores (harmless on v5e/v6e).
    target_rows = _round_up(pl.cdiv(rows, MIN_GRID_STEPS), sub)
    tile_rows = max(sub, min(max_rows, target_rows))
    grid = (pl.cdiv(rows, tile_rows),)  # partial last row-block is masked by Pallas

    n = rows * lane
    return pl.pallas_call(
        _linreg_kernel,
        out_shape=jax.ShapeDtypeStruct((rows, lane), x2d.dtype),
        grid_spec=pl.GridSpec(
            grid=grid,
            in_specs=[
                pl.BlockSpec(memory_space=pltpu.SMEM),                  # weights (f32 scalar)
                pl.BlockSpec(memory_space=pltpu.SMEM),                  # bias    (f32 scalar)
                pl.BlockSpec((tile_rows, lane), lambda i: (i, 0)),      # x tile
            ],
            out_specs=pl.BlockSpec((tile_rows, lane), lambda i: (i, 0)),
        ),
        compiler_params=pltpu.CompilerParams(
            dimension_semantics=("parallel",),  # no reduction axis
        ),
        cost_estimate=pl.CostEstimate(
            flops=2 * n, transcendentals=0, bytes_accessed=2 * n * itemsize),
    )(w32, b32, x2d)


def linear_regression_forward(x: jax.Array, weights: jax.Array, bias: jax.Array) -> jax.Array:
    """Computes weights * x + bias (broadcast scalar affine), matching the PyTorch module."""
    assert weights.shape == (1,) and bias.shape == (1,)
    orig_shape = x.shape
    orig_dtype = x.dtype
    n = x.size

    # SMEM scalar refs hold 32-bit values; compute in f32 like the PyTorch module.
    w32 = weights.astype(jnp.float32)
    b32 = bias.astype(jnp.float32)

    # Tiny-input fallback: pallas_call fixed overhead dominates; fused XLA wins.
    if n < MIN_PALLAS_ELEMENTS:
        return (w32 * x.astype(jnp.float32) + b32).astype(orig_dtype).reshape(orig_shape)

    x_flat = jnp.ravel(x)  # free metadata op for contiguous x

    if n % LANE_DIM == 0:
        # Fast path: pure reshape in, pure reshape out — zero extra HBM passes.
        y2d = _affine_2d(x_flat.reshape(n // LANE_DIM, LANE_DIM), w32, b32)
        return y2d.reshape(orig_shape)

    # Ragged n: pad the flat array up to a full (rows, LANE_DIM) slab and slice back.
    # Padded elements evaluate to b in the kernel output; they are sliced off below
    # and never reduced over, so this is harmless.
    # TODO(synk): replace this pad+slice round trip with a masked manual-DMA tail
    # tile so large ragged N avoids the 1-2 extra HBM passes entirely.
    padded = _round_up(n, LANE_DIM)
    x_flat = jnp.pad(x_flat, (0, padded - n))
    y2d = _affine_2d(x_flat.reshape(padded // LANE_DIM, LANE_DIM), w32, b32)
    return y2d.reshape(-1)[:n].reshape(orig_shape)


if __name__ == "__main__":
    key = jax.random.PRNGKey(0)
    k_w, k_b, k_x1, k_x2, k_x3 = jax.random.split(key, 5)

    # Parameters mirror nn.Parameter(torch.randn(1)) — deterministic here.
    weights = jax.random.normal(k_w, (1,), dtype=jnp.float32)
    bias = jax.random.normal(k_b, (1,), dtype=jnp.float32)

    # Small regression batch matching the PyTorch workflow convention: (N, 1).
    # Goes through the fused-XLA tiny-input path.
    x_small = jax.random.normal(k_x1, (16, 1), dtype=jnp.float32)
    y_small = jax.block_until_ready(linear_regression_forward(x_small, weights, bias))
    assert y_small.shape == x_small.shape and y_small.dtype == x_small.dtype
    assert jnp.allclose(y_small, weights * x_small + bias, atol=1e-6), "mismatch (small)"

    # Larger, LANE_DIM-divisible input: exercises the Pallas fast path (no pad/slice).
    x_main = jax.random.normal(k_x2, (512, 512), dtype=jnp.float32)
    y_main = jax.block_until_ready(linear_regression_forward(x_main, weights, bias))
    assert y_main.shape == x_main.shape and y_main.dtype == x_main.dtype
    assert jnp.allclose(y_main, weights * x_main + bias, atol=1e-6), "mismatch (fast path)"

    # Large ragged input: exercises the padded Pallas path with a partial last block.
    x_ragged = jax.random.normal(k_x3, (131077, 1), dtype=jnp.float32)
    y_ragged = jax.block_until_ready(linear_regression_forward(x_ragged, weights, bias))
    assert y_ragged.shape == x_ragged.shape and y_ragged.dtype == x_ragged.dtype
    assert jnp.allclose(y_ragged, weights * x_ragged + bias, atol=1e-6), "mismatch (ragged)"

    print("KERNEL_OK")
</pallas_src>

<mosaic_0001>
module attributes {stable_mosaic.version = 11 : i64} {
  func.func @_linreg_kernel(%arg0: i32, %arg1: memref<1xf32, #tpu.memory_space<smem>>, %arg2: memref<1xf32, #tpu.memory_space<smem>>, %arg3: memref<128x512xf32, #tpu.memory_space<vmem>>, %arg4: memref<128x512xf32, #tpu.memory_space<vmem>>) attributes {dimension_semantics = [#tpu.dimension_semantics<parallel>], iteration_bounds = array<i64: 4>, scalar_prefetch = 0 : i64, scratch_operands = 0 : i64, tpu.core_type = #tpu.core_type<tc>, window_params = [{transform_indices = @transform_0, window_bounds = array<i64: 1>}, {transform_indices = @transform_1, window_bounds = array<i64: 1>}, {transform_indices = @transform_2, window_bounds = array<i64: 128, 512>}, {transform_indices = @transform_3, window_bounds = array<i64: 128, 512>}]} {
    %c0 = arith.constant 0 : index
    %c0_0 = arith.constant 0 : index
    %0 = vector.load %arg3[%c0, %c0_0] : memref<128x512xf32, #tpu.memory_space<vmem>>, vector<128x512xf32>
    %c0_1 = arith.constant 0 : index
    %1 = memref.load %arg1[%c0_1] : memref<1xf32, #tpu.memory_space<smem>>
    %2 = vector.broadcast %1 : f32 to vector<128x512xf32>
    %3 = arith.mulf %0, %2 : vector<128x512xf32>
    %c0_2 = arith.constant 0 : index
    %4 = memref.load %arg2[%c0_2] : memref<1xf32, #tpu.memory_space<smem>>
    %5 = vector.broadcast %4 : f32 to vector<128x512xf32>
    %6 = arith.addf %3, %5 : vector<128x512xf32>
    %c0_3 = arith.constant 0 : index
    %c0_4 = arith.constant 0 : index
    %7 = vector.load %arg4[%c0_3, %c0_4] : memref<128x512xf32, #tpu.memory_space<vmem>>, vector<128x512xf32>
    tpu.vector_store %arg4[%c0_3, %c0_4], %6 {strides = array<i32>} : memref<128x512xf32, #tpu.memory_space<vmem>>, vector<128x512xf32>,
    return
  }
  func.func @transform_0(%arg0: i32) -> i32 {
    %c0_i32 = arith.constant 0 : i32
    %c0_i32_0 = arith.constant 0 : i32
    return %c0_i32 : i32
  }
  func.func @transform_1(%arg0: i32) -> i32 {
    %c0_i32 = arith.constant 0 : i32
    %c0_i32_0 = arith.constant 0 : i32
    return %c0_i32 : i32
  }
  func.func @transform_2(%arg0: i32) -> (i32, i32) {
    %c0_i32 = arith.constant 0 : i32
    %c0_i32_0 = arith.constant 0 : i32
    return %arg0, %c0_i32 : i32, i32
  }
  func.func @transform_3(%arg0: i32) -> (i32, i32) {
    %c0_i32 = arith.constant 0 : i32
    %c0_i32_0 = arith.constant 0 : i32
    return %arg0, %c0_i32 : i32, i32
  }
}

</mosaic_0001>

<llo_original>
// kernel: tpu_custom_call.1
$region0: #{tpu_custom_call.1}
  #allocation0 [shape = 'u32[]', space=smem, size = 0x4, offset = 0x4, fixed_abs, tag = 'smem constant byte address 0x4 - core index']
  #allocation1 [shape = 'u32[144,128]{1,0:T(1,128)}', space=vmem, size = 0x12000, scoped, tag = 'internal scratch']
  #allocation2 [shape = 'f32[1]{0:T(128)S(6)}', space=smem, size = 0x200, scoped, tag = 'scoped memory for tpu_custom_call.1']
  #allocation3 [shape = 'f32[1]{0:T(128)S(6)}', space=smem, size = 0x200, scoped, tag = 'scoped memory for tpu_custom_call.1']
  %s0 = inlined_call_operand.<no memory space> [shape: f32[1], index: 0, kind: input, shape index: {}]
  %s1 = inlined_call_operand.<no memory space> [shape: f32[1], index: 1, kind: input, shape index: {}]
  %s2 = inlined_call_operand.hbm [shape: f32[512,512], index: 2, kind: input, shape index: {}]
  %s3 = inlined_call_operand.hbm [shape: f32[512,512], index: 3, kind: output, shape index: {}]
  %s4 = sld [smem:[#allocation0]]
  $region49: #{tpu_custom_call.1} parent=0
    _
  %s6 = ssub.s32 1, %s4
  %s7 = scalar_select 0, %s6, %s4
  %8 = sst [smem:[#allocation2]] %s0
  %9 = sst [smem:[#allocation3]] %s1
  $region1: #{tpu_custom_call.1} parent=0
    #allocation4 [shape = 'u8[524288]{0}', space=vmem, size = 0x80000, scoped, tag = 'input window, operand 2']
    #allocation5 [shape = 's32[2]{0}', space=sflag, size = 0x8, scoped, tag = 'scoped memory for tpu_custom_call.1']
    #allocation6 [shape = 's32[2]{0}', space=sflag, size = 0x8, scoped, tag = 'scoped memory for tpu_custom_call.1']
    #allocation7 [shape = 'u8[524288]{0}', space=vmem, size = 0x80000, scoped, tag = 'output window, operand 0']
    %10 = vsyncpa [#allocation5], 0
    %s11 = scalar_lea.sflag [#allocation5], 1
    %12 = vsyncpa %s11, 0
    %13 = vsyncpa [#allocation6], 0
    %s14 = scalar_lea.sflag [#allocation6], 1
    %15 = vsyncpa %s14, 0
    loop: start=0, step=1, limit=6
    $region2: #{tpu_custom_call.1} parent=1 // loop_pre_header
      _
    $region3: #{tpu_custom_call.1} parent=1 // loop_header
      %s17 = sphi 0, %s21
      %p18 = scmp.ge.s32.totalorder %s17, 6
      %s25 = sphi 0, %s25
      %s27 = sphi 0, %s25
      %s28 = sphi 0, %s27
      %s42 = sphi 0, %s28
      %s46 = sphi 0, %s46
      %s48 = sphi 0, %s46
      %s49 = sphi 0, %s48
      %s63 = sphi 0, %s49
      %s69 = sphi 0, %s71
      %s72 = sphi 0, %s69
      %s73 = sphi 0, %s72
      %s89 = sphi 0, %s73
      %s95 = sphi 0, %s97
      %s98 = sphi 0, %s95
      %s99 = sphi 0, %s98
      %s115 = sphi 0, %s99
    $region4: #{tpu_custom_call.1} parent=1 // loop_header_branch
      %20 = sbr.rel (%p18) target = $region8
    $region5: #{tpu_custom_call.1} parent=1 // loop_body
      %s22 = ssub.s32 %s17, 1
      %s23 = ssub.s32 %s17, 2
      %s24 = sadd.s32 %s17, 1
      %s26 = sadd.s32 %s25, 1
      %p29 = scmp.eq.s32.totalorder %s17, 3
      %p30 = scmp.ne.s32.totalorder %s25, %s27
      %p31 = scmp.eq.s32.totalorder %s17, 0
      %p32 = por %p30, %p31
      %p33 = scmp.ne.s32.totalorder %s25, %s27
      %p34 = scmp.eq.s32.totalorder %s22, 3
      %p35 = por %p33, %p34
      %p36 = scmp.ne.s32.totalorder %s27, %s28
      %p37 = scmp.eq.s32.totalorder %s22, 0
      %p38 = por %p36, %p37
      %p39 = scmp.ne.s32.totalorder %s27, %s28
      %p40 = scmp.eq.s32.totalorder %s23, 3
      %p41 = por %p39, %p40
      %p43 = scmp.ne.s32.totalorder %s28, %s42
      %p44 = scmp.eq.s32.totalorder %s23, 0
      %p45 = por %p43, %p44
      %s47 = sadd.s32 %s46, 1
      %p50 = scmp.eq.s32.totalorder %s17, 3
      %p51 = scmp.ne.s32.totalorder %s46, %s48
      %p52 = scmp.eq.s32.totalorder %s17, 0
      %p53 = por %p51, %p52
      %p54 = scmp.ne.s32.totalorder %s46, %s48
      %p55 = scmp.eq.s32.totalorder %s22, 3
      %p56 = por %p54, %p55
      %p57 = scmp.ne.s32.totalorder %s48, %s49
      %p58 = scmp.eq.s32.totalorder %s22, 0
      %p59 = por %p57, %p58
      %p60 = scmp.ne.s32.totalorder %s48, %s49
      %p61 = scmp.eq.s32.totalorder %s23, 3
      %p62 = por %p60, %p61
      %p64 = scmp.ne.s32.totalorder %s49, %s63
      %p65 = scmp.eq.s32.totalorder %s23, 0
      %p66 = por %p64, %p65
      %s67 = ssub.s32 %s17, %s24
      %p68 = scmp.eq.s32.totalorder %s67, 0
      %s70 = sadd.s32 %s69, 1
      %s71 = scalar_select %p68, %s69, %s70
      %p74 = pneg %p68
      %p75 = scmp.eq.s32.totalorder %s17, 3
      %p76 = por %p74, %p75
      %p77 = scmp.ne.s32.totalorder %s69, %s72
      %p78 = scmp.eq.s32.totalorder %s17, 0
      %p79 = por %p77, %p78
      %p80 = scmp.ne.s32.totalorder %s69, %s72
      %p81 = scmp.eq.s32.totalorder %s22, 3
      %p82 = por %p80, %p81
      %p83 = scmp.ne.s32.totalorder %s72, %s73
      %p84 = scmp.eq.s32.totalorder %s22, 0
      %p85 = por %p83, %p84
      %p86 = scmp.ne.s32.totalorder %s72, %s73
      %p87 = scmp.eq.s32.totalorder %s23, 3
      %p88 = por %p86, %p87
      %p90 = scmp.ne.s32.totalorder %s73, %s89
      %p91 = scmp.eq.s32.totalorder %s23, 0
      %p92 = por %p90, %p91
      %s93 = ssub.s32 %s17, %s24
      %p94 = scmp.eq.s32.totalorder %s93, 0
      %s96 = sadd.s32 %s95, 1
      %s97 = scalar_select %p94, %s95, %s96
      %p100 = pneg %p94
      %p101 = scmp.eq.s32.totalorder %s17, 3
      %p102 = por %p100, %p101
      %p103 = scmp.ne.s32.totalorder %s95, %s98
      %p104 = scmp.eq.s32.totalorder %s17, 0
      %p105 = por %p103, %p104
      %p106 = scmp.ne.s32.totalorder %s95, %s98
      %p107 = scmp.eq.s32.totalorder %s22, 3
      %p108 = por %p106, %p107
      %p109 = scmp.ne.s32.totalorder %s98, %s99
      %p110 = scmp.eq.s32.totalorder %s22, 0
      %p111 = por %p109, %p110
      %p112 = scmp.ne.s32.totalorder %s98, %s99
      %p113 = scmp.eq.s32.totalorder %s23, 3
      %p114 = por %p112, %p113
      %p116 = scmp.ne.s32.totalorder %s99, %s115
      %p117 = scmp.eq.s32.totalorder %s23, 0
      %p118 = por %p116, %p117
      %p119 = scmp.le.s32.totalorder 1, %s17
      %p120 = scmp.lt.s32.totalorder %s17, 5
      %p121 = pnand %p119, %p120
      %p122 = pneg %p121
      // Predicated region
      $region9: #{tpu_custom_call.1} parent=5 // pred_check
        _
      $region10: #{tpu_custom_call.1} parent=5 // pred_check_branch
        %124 = sbr.rel (%p121) target = $region12
      $region11: #{tpu_custom_call.1} parent=5 // pred_region
        %s125 = ssub.s32 %s17, 1
        // Predicated region
        $region13: #{tpu_custom_call.1} parent=11 // pred_check
          %p126 = pneg %p38
        $region14: #{tpu_custom_call.1} parent=11 // pred_check_branch
          %128 = sbr.rel (%p126) target = $region16
        $region15: #{tpu_custom_call.1} parent=11 // pred_region
          _
        $region16: #{tpu_custom_call.1} parent=11 // pred_fallthru
          _
        // Predicated region
        $region17: #{tpu_custom_call.1} parent=11 // pred_check
          %p129 = pneg %p59
        $region18: #{tpu_custom_call.1} parent=11 // pred_check_branch
          %131 = sbr.rel (%p129) target = $region20
        $region19: #{tpu_custom_call.1} parent=11 // pred_region
          _
        $region20: #{tpu_custom_call.1} parent=11 // pred_fallthru
          _
      $region12: #{tpu_custom_call.1} parent=5 // pred_fallthru
        _
      %p132 = scmp.lt.s32.totalorder %s17, 4
      // Predicated region
      $region21: #{tpu_custom_call.1} parent=5 // pred_check
        %p133 = pneg %p132
      $region22: #{tpu_custom_call.1} parent=5 // pred_check_branch
        %135 = sbr.rel (%p133) target = $region24
      $region23: #{tpu_custom_call.1} parent=5 // pred_region
        // Predicated region
        $region25: #{tpu_custom_call.1} parent=23 // pred_check
          %p136 = pneg %p79
        $region26: #{tpu_custom_call.1} parent=23 // pred_check_branch
          %138 = sbr.rel (%p136) target = $region28
        $region27: #{tpu_custom_call.1} parent=23 // pred_region
          %s139 = sand.u32 %s69, 1
          %s140 = scalar_lea.sflag [#allocation5], %s139
          %s141 = sand.u32 %s69, 1
          %s142 = smul.addr %s141, 512
          %s143 = scalar_lea.vmem [#allocation4], %s142
          %s144 = smul.u32 16, %s17
          %s146 = ssub.s32 8192, 8192
          %147 = vsyncadd %s140, %s146
          %s148 = smul.addr %s144, 4
          %s149 = smul.addr %s148, 128
          %s150 = scalar_lea.hbm %s2, %s149
          %s151 = sshll.u32 %s143, 4
          %s152 = int_to_ptr.vmem [resolvable:$true] %s151
          %157 = dma.hbm_to_vmem [thread:$0]  %s150, 8192, %s152, %s140, 512, 512, 32
        $region28: #{tpu_custom_call.1} parent=23 // pred_fallthru
          _
      $region24: #{tpu_custom_call.1} parent=5 // pred_fallthru
        _
      %p158 = scmp.le.s32.totalorder 1, %s17
      %p159 = scmp.lt.s32.totalorder %s17, 5
      %p160 = pnand %p158, %p159
      %p161 = pneg %p160
      // Predicated region
      $region29: #{tpu_custom_call.1} parent=5 // pred_check
        _
      $region30: #{tpu_custom_call.1} parent=5 // pred_check_branch
        %163 = sbr.rel (%p160) target = $region32
      $region31: #{tpu_custom_call.1} parent=5 // pred_region
        %s164 = ssub.s32 %s17, 1
        %s165 = sand.u32 %s72, 1
        %s166 = scalar_lea.sflag [#allocation5], %s165
        %s167 = sand.u32 %s72, 1
        %s168 = smul.addr %s167, 512
        %s169 = scalar_lea.vmem [#allocation4], %s168
        // Predicated region
        $region33: #{tpu_custom_call.1} parent=31 // pred_check
          %p170 = pneg %p85
        $region34: #{tpu_custom_call.1} parent=31 // pred_check_branch
          %172 = sbr.rel (%p170) target = $region36
        $region35: #{tpu_custom_call.1} parent=31 // pred_region
          %173 = dma.done %s166, 8192
        $region36: #{tpu_custom_call.1} parent=31 // pred_fallthru
          _
        %p174 = pneg %p38
        %p175 = pneg %p35
        %p176 = pneg %p59
        %p177 = pneg %p56
        %s178 = sand.u32 %s72, 1
        %s179 = scalar_lea.sflag [#allocation5], %s178
        %s180 = sand.u32 %s72, 1
        %s181 = smul.addr %s180, 512
        %s182 = scalar_lea.vmem [#allocation4], %s181
        %p183 = pneg %p85
        %p184 = pneg %p82
        %p185 = pneg %p111
        %p186 = pneg %p108
        %s187 = sand.u32 %s98, 1
        %s188 = scalar_lea.sflag [#allocation6], %s187
        %s189 = sand.u32 %s98, 1
        %s190 = smul.addr %s189, 512
        %s191 = scalar_lea.vmem [#allocation7], %s190
        %s192 = smul.u32 16, %s22
        %s193 = smul.u32 16, %s22
        %v194 = vld [vmem:[%s169] sm:$0xff]
        %v195 = vld [vmem:[%s169 + $0x8] sm:$0xff]
        %v196 = vld [vmem:[%s169 + $0x10] sm:$0xff]
        %v197 = vld [vmem:[%s169 + $0x18] sm:$0xff]
        %v198 = vld [vmem:[%s169 + $0x20] sm:$0xff]
        %v199 = vld [vmem:[%s169 + $0x28] sm:$0xff]
        %v200 = vld [vmem:[%s169 + $0x30] sm:$0xff]
        %v201 = vld [vmem:[%s169 + $0x38] sm:$0xff]
        %v202 = vld [vmem:[%s169 + $0x40] sm:$0xff]
        %v203 = vld [vmem:[%s169 + $0x48] sm:$0xff]
        %v204 = vld [vmem:[%s169 + $0x50] sm:$0xff]
        %v205 = vld [vmem:[%s169 + $0x58] sm:$0xff]
        %v206 = vld [vmem:[%s169 + $0x60] sm:$0xff]
        %v207 = vld [vmem:[%s169 + $0x68] sm:$0xff]
        %v208 = vld [vmem:[%s169 + $0x70] sm:$0xff]
        %v209 = vld [vmem:[%s169 + $0x78] sm:$0xff]
        %v210 = vld [vmem:[%s169 + $0x80] sm:$0xff]
        %v211 = vld [vmem:[%s169 + $0x88] sm:$0xff]
        %v212 = vld [vmem:[%s169 + $0x90] sm:$0xff]
        %v213 = vld [vmem:[%s169 + $0x98] sm:$0xff]
        %v214 = vld [vmem:[%s169 + $0xa0] sm:$0xff]
        %v215 = vld [vmem:[%s169 + $0xa8] sm:$0xff]
        %v216 = vld [vmem:[%s169 + $0xb0] sm:$0xff]
        %v217 = vld [vmem:[%s169 + $0xb8] sm:$0xff]
        %v218 = vld [vmem:[%s169 + $0xc0] sm:$0xff]
        %v219 = vld [vmem:[%s169 + $0xc8] sm:$0xff]
        %v220 = vld [vmem:[%s169 + $0xd0] sm:$0xff]
        %v221 = vld [vmem:[%s169 + $0xd8] sm:$0xff]
        %v222 = vld [vmem:[%s169 + $0xe0] sm:$0xff]
        %v223 = vld [vmem:[%s169 + $0xe8] sm:$0xff]
        %v224 = vld [vmem:[%s169 + $0xf0] sm:$0xff]
        %v225 = vld [vmem:[%s169 + $0xf8] sm:$0xff]
        %v226 = vld [vmem:[%s169 + $0x100] sm:$0xff]
        %v227 = vld [vmem:[%s169 + $0x108] sm:$0xff]
        %v228 = vld [vmem:[%s169 + $0x110] sm:$0xff]
        %v229 = vld [vmem:[%s169 + $0x118] sm:$0xff]
        %v230 = vld [vmem:[%s169 + $0x120] sm:$0xff]
        %v231 = vld [vmem:[%s169 + $0x128] sm:$0xff]
        %v232 = vld [vmem:[%s169 + $0x130] sm:$0xff]
        %v233 = vld [vmem:[%s169 + $0x138] sm:$0xff]
        %v234 = vld [vmem:[%s169 + $0x140] sm:$0xff]
        %v235 = vld [vmem:[%s169 + $0x148] sm:$0xff]
        %v236 = vld [vmem:[%s169 + $0x150] sm:$0xff]
        %v237 = vld [vmem:[%s169 + $0x158] sm:$0xff]
        %v238 = vld [vmem:[%s169 + $0x160] sm:$0xff]
        %v239 = vld [vmem:[%s169 + $0x168] sm:$0xff]
        %v240 = vld [vmem:[%s169 + $0x170] sm:$0xff]
        %v241 = vld [vmem:[%s169 + $0x178] sm:$0xff]
        %v242 = vld [vmem:[%s169 + $0x180] sm:$0xff]
        %v243 = vld [vmem:[%s169 + $0x188] sm:$0xff]
        %v244 = vld [vmem:[%s169 + $0x190] sm:$0xff]
        %v245 = vld [vmem:[%s169 + $0x198] sm:$0xff]
        %v246 = vld [vmem:[%s169 + $0x1a0] sm:$0xff]
        %v247 = vld [vmem:[%s169 + $0x1a8] sm:$0xff]
        %v248 = vld [vmem:[%s169 + $0x1b0] sm:$0xff]
        %v249 = vld [vmem:[%s169 + $0x1b8] sm:$0xff]
        %v250 = vld [vmem:[%s169 + $0x1c0] sm:$0xff]
        %v251 = vld [vmem:[%s169 + $0x1c8] sm:$0xff]
        %v252 = vld [vmem:[%s169 + $0x1d0] sm:$0xff]
        %v253 = vld [vmem:[%s169 + $0x1d8] sm:$0xff]
        %v254 = vld [vmem:[%s169 + $0x1e0] sm:$0xff]
        %v255 = vld [vmem:[%s169 + $0x1e8] sm:$0xff]
        %v256 = vld [vmem:[%s169 + $0x1f0] sm:$0xff]
        %v257 = vld [vmem:[%s169 + $0x1f8] sm:$0xff]
        %s258 = sld [smem:[#allocation2]]
        %v259 = vstv %s258
        %v260 = vmul.f32 %v194, %v259
        %v261 = vmul.f32 %v195, %v259
        %v262 = vmul.f32 %v196, %v259
        %v263 = vmul.f32 %v197, %v259
        %v264 = vmul.f32 %v198, %v259
        %v265 = vmul.f32 %v199, %v259
        %v266 = vmul.f32 %v200, %v259
        %v267 = vmul.f32 %v201, %v259
        %v268 = vmul.f32 %v202, %v259
        %v269 = vmul.f32 %v203, %v259
        %v270 = vmul.f32 %v204, %v259
        %v271 = vmul.f32 %v205, %v259
        %v272 = vmul.f32 %v206, %v259
        %v273 = vmul.f32 %v207, %v259
        %v274 = vmul.f32 %v208, %v259
        %v275 = vmul.f32 %v209, %v259
        %v276 = vmul.f32 %v210, %v259
        %v277 = vmul.f32 %v211, %v259
        %v278 = vmul.f32 %v212, %v259
        %v279 = vmul.f32 %v213, %v259
        %v280 = vmul.f32 %v214, %v259
        %v281 = vmul.f32 %v215, %v259
        %v282 = vmul.f32 %v216, %v259
        %v283 = vmul.f32 %v217, %v259
        %v284 = vmul.f32 %v218, %v259
        %v285 = vmul.f32 %v219, %v259
        %v286 = vmul.f32 %v220, %v259
        %v287 = vmul.f32 %v221, %v259
        %v288 = vmul.f32 %v222, %v259
        %v289 = vmul.f32 %v223, %v259
        %v290 = vmul.f32 %v224, %v259
        %v291 = vmul.f32 %v225, %v259
        %v292 = vmul.f32 %v226, %v259
        %v293 = vmul.f32 %v227, %v259
        %v294 = vmul.f32 %v228, %v259
        %v295 = vmul.f32 %v229, %v259
        %v296 = vmul.f32 %v230, %v259
        %v297 = vmul.f32 %v231, %v259
        %v298 = vmul.f32 %v232, %v259
        %v299 = vmul.f32 %v233, %v259
        %v300 = vmul.f32 %v234, %v259
        %v301 = vmul.f32 %v235, %v259
        %v302 = vmul.f32 %v236, %v259
        %v303 = vmul.f32 %v237, %v259
        %v304 = vmul.f32 %v238, %v259
        %v305 = vmul.f32 %v239, %v259
        %v306 = vmul.f32 %v240, %v259
        %v307 = vmul.f32 %v241, %v259
        %v308 = vmul.f32 %v242, %v259
        %v309 = vmul.f32 %v243, %v259
        %v310 = vmul.f32 %v244, %v259
        %v311 = vmul.f32 %v245, %v259
        %v312 = vmul.f32 %v246, %v259
        %v313 = vmul.f32 %v247, %v259
        %v314 = vmul.f32 %v248, %v259
        %v315 = vmul.f32 %v249, %v259
        %v316 = vmul.f32 %v250, %v259
        %v317 = vmul.f32 %v251, %v259
        %v318 = vmul.f32 %v252, %v259
        %v319 = vmul.f32 %v253, %v259
        %v320 = vmul.f32 %v254, %v259
        %v321 = vmul.f32 %v255, %v259
        %v322 = vmul.f32 %v256, %v259
        %v323 = vmul.f32 %v257, %v259
        %s324 = sld [smem:[#allocation3]]
        %v325 = vstv %s324
        %v326 = vadd.f32 %v260, %v325
        %v327 = vadd.f32 %v261, %v325
        %v328 = vadd.f32 %v262, %v325
        %v329 = vadd.f32 %v263, %v325
        %v330 = vadd.f32 %v264, %v325
        %v331 = vadd.f32 %v265, %v325
        %v332 = vadd.f32 %v266, %v325
        %v333 = vadd.f32 %v267, %v325
        %v334 = vadd.f32 %v268, %v325
        %v335 = vadd.f32 %v269, %v325
        %v336 = vadd.f32 %v270, %v325
        %v337 = vadd.f32 %v271, %v325
        %v338 = vadd.f32 %v272, %v325
        %v339 = vadd.f32 %v273, %v325
        %v340 = vadd.f32 %v274, %v325
        %v341 = vadd.f32 %v275, %v325
        %v342 = vadd.f32 %v276, %v325
        %v343 = vadd.f32 %v277, %v325
        %v344 = vadd.f32 %v278, %v325
        %v345 = vadd.f32 %v279, %v325
        %v346 = vadd.f32 %v280, %v325
        %v347 = vadd.f32 %v281, %v325
        %v348 = vadd.f32 %v282, %v325
        %v349 = vadd.f32 %v283, %v325
        %v350 = vadd.f32 %v284, %v325
        %v351 = vadd.f32 %v285, %v325
        %v352 = vadd.f32 %v286, %v325
        %v353 = vadd.f32 %v287, %v325
        %v354 = vadd.f32 %v288, %v325
        %v355 = vadd.f32 %v289, %v325
        %v356 = vadd.f32 %v290, %v325
        %v357 = vadd.f32 %v291, %v325
        %v358 = vadd.f32 %v292, %v325
        %v359 = vadd.f32 %v293, %v325
        %v360 = vadd.f32 %v294, %v325
        %v361 = vadd.f32 %v295, %v325
        %v362 = vadd.f32 %v296, %v325
        %v363 = vadd.f32 %v297, %v325
        %v364 = vadd.f32 %v298, %v325
        %v365 = vadd.f32 %v299, %v325
        %v366 = vadd.f32 %v300, %v325
        %v367 = vadd.f32 %v301, %v325
        %v368 = vadd.f32 %v302, %v325
        %v369 = vadd.f32 %v303, %v325
        %v370 = vadd.f32 %v304, %v325
        %v371 = vadd.f32 %v305, %v325
        %v372 = vadd.f32 %v306, %v325
        %v373 = vadd.f32 %v307, %v325
        %v374 = vadd.f32 %v308, %v325
        %v375 = vadd.f32 %v309, %v325
        %v376 = vadd.f32 %v310, %v325
        %v377 = vadd.f32 %v311, %v325
        %v378 = vadd.f32 %v312, %v325
        %v379 = vadd.f32 %v313, %v325
        %v380 = vadd.f32 %v314, %v325
        %v381 = vadd.f32 %v315, %v325
        %v382 = vadd.f32 %v316, %v325
        %v383 = vadd.f32 %v317, %v325
        %v384 = vadd.f32 %v318, %v325
        %v385 = vadd.f32 %v319, %v325
        %v386 = vadd.f32 %v320, %v325
        %v387 = vadd.f32 %v321, %v325
        %v388 = vadd.f32 %v322, %v325
        %v389 = vadd.f32 %v323, %v325
        %390 = vst [vmem:[%s191] sm:$0xff] %v326
        %391 = vst [vmem:[%s191 + $0x8] sm:$0xff] %v327
        %392 = vst [vmem:[%s191 + $0x10] sm:$0xff] %v328
        %393 = vst [vmem:[%s191 + $0x18] sm:$0xff] %v329
        %394 = vst [vmem:[%s191 + $0x20] sm:$0xff] %v330
        %395 = vst [vmem:[%s191 + $0x28] sm:$0xff] %v331
        %396 = vst [vmem:[%s191 + $0x30] sm:$0xff] %v332
        %397 = vst [vmem:[%s191 + $0x38] sm:$0xff] %v333
        %398 = vst [vmem:[%s191 + $0x40] sm:$0xff] %v334
        %399 = vst [vmem:[%s191 + $0x48] sm:$0xff] %v335
        %400 = vst [vmem:[%s191 + $0x50] sm:$0xff] %v336
        %401 = vst [vmem:[%s191 + $0x58] sm:$0xff] %v337
        %402 = vst [vmem:[%s191 + $0x60] sm:$0xff] %v338
        %403 = vst [vmem:[%s191 + $0x68] sm:$0xff] %v339
        %404 = vst [vmem:[%s191 + $0x70] sm:$0xff] %v340
        %405 = vst [vmem:[%s191 + $0x78] sm:$0xff] %v341
        %406 = vst [vmem:[%s191 + $0x80] sm:$0xff] %v342
        %407 = vst [vmem:[%s191 + $0x88] sm:$0xff] %v343
        %408 = vst [vmem:[%s191 + $0x90] sm:$0xff] %v344
        %409 = vst [vmem:[%s191 + $0x98] sm:$0xff] %v345
        %410 = vst [vmem:[%s191 + $0xa0] sm:$0xff] %v346
        %411 = vst [vmem:[%s191 + $0xa8] sm:$0xff] %v347
        %412 = vst [vmem:[%s191 + $0xb0] sm:$0xff] %v348
        %413 = vst [vmem:[%s191 + $0xb8] sm:$0xff] %v349
        %414 = vst [vmem:[%s191 + $0xc0] sm:$0xff] %v350
        %415 = vst [vmem:[%s191 + $0xc8] sm:$0xff] %v351
        %416 = vst [vmem:[%s191 + $0xd0] sm:$0xff] %v352
        %417 = vst [vmem:[%s191 + $0xd8] sm:$0xff] %v353
        %418 = vst [vmem:[%s191 + $0xe0] sm:$0xff] %v354
        %419 = vst [vmem:[%s191 + $0xe8] sm:$0xff] %v355
        %420 = vst [vmem:[%s191 + $0xf0] sm:$0xff] %v356
        %421 = vst [vmem:[%s191 + $0xf8] sm:$0xff] %v357
        %422 = vst [vmem:[%s191 + $0x100] sm:$0xff] %v358
        %423 = vst [vmem:[%s191 + $0x108] sm:$0xff] %v359
        %424 = vst [vmem:[%s191 + $0x110] sm:$0xff] %v360
        %425 = vst [vmem:[%s191 + $0x118] sm:$0xff] %v361
        %426 = vst [vmem:[%s191 + $0x120] sm:$0xff] %v362
        %427 = vst [vmem:[%s191 + $0x128] sm:$0xff] %v363
        %428 = vst [vmem:[%s191 + $0x130] sm:$0xff] %v364
        %429 = vst [vmem:[%s191 + $0x138] sm:$0xff] %v365
        %430 = vst [vmem:[%s191 + $0x140] sm:$0xff] %v366
        %431 = vst [vmem:[%s191 + $0x148] sm:$0xff] %v367
        %432 = vst [vmem:[%s191 + $0x150] sm:$0xff] %v368
        %433 = vst [vmem:[%s191 + $0x158] sm:$0xff] %v369
        %434 = vst [vmem:[%s191 + $0x160] sm:$0xff] %v370
        %435 = vst [vmem:[%s191 + $0x168] sm:$0xff] %v371
        %436 = vst [vmem:[%s191 + $0x170] sm:$0xff] %v372
        %437 = vst [vmem:[%s191 + $0x178] sm:$0xff] %v373
        %438 = vst [vmem:[%s191 + $0x180] sm:$0xff] %v374
        %439 = vst [vmem:[%s191 + $0x188] sm:$0xff] %v375
        %440 = vst [vmem:[%s191 + $0x190] sm:$0xff] %v376
        %441 = vst [vmem:[%s191 + $0x198] sm:$0xff] %v377
        %442 = vst [vmem:[%s191 + $0x1a0] sm:$0xff] %v378
        %443 = vst [vmem:[%s191 + $0x1a8] sm:$0xff] %v379
        %444 = vst [vmem:[%s191 + $0x1b0] sm:$0xff] %v380
        %445 = vst [vmem:[%s191 + $0x1b8] sm:$0xff] %v381
        %446 = vst [vmem:[%s191 + $0x1c0] sm:$0xff] %v382
        %447 = vst [vmem:[%s191 + $0x1c8] sm:$0xff] %v383
        %448 = vst [vmem:[%s191 + $0x1d0] sm:$0xff] %v384
        %449 = vst [vmem:[%s191 + $0x1d8] sm:$0xff] %v385
        %450 = vst [vmem:[%s191 + $0x1e0] sm:$0xff] %v386
        %451 = vst [vmem:[%s191 + $0x1e8] sm:$0xff] %v387
        %452 = vst [vmem:[%s191 + $0x1f0] sm:$0xff] %v388
        %453 = vst [vmem:[%s191 + $0x1f8] sm:$0xff] %v389
        %s454 = sand.u32 %s98, 1
        %s455 = scalar_lea.sflag [#allocation6], %s454
        %s456 = sand.u32 %s98, 1
        %s457 = smul.addr %s456, 512
        %s458 = scalar_lea.vmem [#allocation7], %s457
        // Predicated region
        $region37: #{tpu_custom_call.1} parent=31 // pred_check
          %p459 = pneg %p108
        $region38: #{tpu_custom_call.1} parent=31 // pred_check_branch
          %461 = sbr.rel (%p459) target = $region40
        $region39: #{tpu_custom_call.1} parent=31 // pred_region
          %s462 = smul.u32 16, %s22
          %s464 = ssub.s32 8192, 8192
          %465 = vsyncadd %s455, %s464
          %s466 = smul.addr %s462, 4
          %s467 = smul.addr %s466, 128
          %s468 = scalar_lea.hbm %s3, %s467
          %s469 = sshll.u32 %s458, 4
          %s470 = int_to_ptr.vmem [resolvable:$true] %s469
          %475 = dma.vmem_to_hbm [thread:$0]  %s470, 8192, %s468, %s455, 512, 512, 32
        $region40: #{tpu_custom_call.1} parent=31 // pred_fallthru
          _
      $region32: #{tpu_custom_call.1} parent=5 // pred_fallthru
        _
      %p476 = scmp.le.s32.totalorder 2, %s17
      // Predicated region
      $region41: #{tpu_custom_call.1} parent=5 // pred_check
        %p477 = pneg %p476
      $region42: #{tpu_custom_call.1} parent=5 // pred_check_branch
        %479 = sbr.rel (%p477) target = $region44
      $region43: #{tpu_custom_call.1} parent=5 // pred_region
        %s480 = ssub.s32 %s17, 2
        // Predicated region
        $region45: #{tpu_custom_call.1} parent=43 // pred_check
          %p481 = pneg %p114
        $region46: #{tpu_custom_call.1} parent=43 // pred_check_branch
          %483 = sbr.rel (%p481) target = $region48
        $region47: #{tpu_custom_call.1} parent=43 // pred_region
          %s484 = sand.u32 %s99, 1
          %s485 = scalar_lea.sflag [#allocation6], %s484
          %s486 = sand.u32 %s99, 1
          %s487 = smul.addr %s486, 512
          %s488 = scalar_lea.vmem [#allocation7], %s487
          %489 = dma.done %s485, 8192
        $region48: #{tpu_custom_call.1} parent=43 // pred_fallthru
          _
      $region44: #{tpu_custom_call.1} parent=5 // pred_fallthru
        _
    $region6: #{tpu_custom_call.1} parent=1 // loop_footer
      %s21 = sadd.s32 1, %s17
    $region7: #{tpu_custom_call.1} parent=1 // loop_footer_branch
      %16 = sbr.rel target = $region3
    $region8: #{tpu_custom_call.1} parent=1 // loop_exit
      _
    %490 = vsyncpa [#allocation5], 1
    %s491 = scalar_lea.sflag [#allocation5], 1
    %492 = vsyncpa %s491, 1
    %493 = vsyncpa [#allocation6], 1
    %s494 = scalar_lea.sflag [#allocation6], 1
    %495 = vsyncpa %s494, 1

</llo_original>
